<compile_context>
chip_gen: v6e
topology: v6e:2x2x1
jax: 0.10.0
libtpu: 0.0.40
codegen_flags: <defaults>
</compile_context>

<pallas_src>
import functools

import jax
import jax.numpy as jnp
from jax.experimental import pallas as pl
from jax.experimental.pallas import tpu as pltpu


def _round_up(x, m):
    return ((x + m - 1) // m) * m


def _vmem_capacity_bytes():
    """Physical VMEM per TensorCore; conservative (v7x) fallback."""
    try:
        return int(pltpu.get_tpu_info().vmem_capacity_bytes)
    except Exception:  # pragma: no cover - older runtimes
        return 64 << 20


def _pad_cast(x, shape, dtype):
    """Cast + zero-pad to `shape`; skips the pad pass when already aligned."""
    x = x.astype(dtype)
    if tuple(x.shape) == tuple(shape):
        return x
    idx = tuple(slice(0, s) for s in x.shape)
    return jnp.zeros(shape, dtype).at[idx].set(x)


def _gcn_kernel(a_ref, h_ref, w_ref, b_ref, o_ref, acc_ref, *, tk, resident_h):
    """One (row-tile i, contraction-tile k) grid step.

    a_ref : [TM, TK]            bf16 adjacency tile (A[dst, src])
    h_ref : [Ncols, Fi]|[TK,Fi] bf16 node features (VMEM-resident or tiled)
    w_ref : [Fi, Fo]            bf16 resident transposed linear weight (W^T)
    b_ref : [1,  Fo]            f32 resident bias
    o_ref : [TM, Fo]            f32 output tile (resident across the k axis)
    acc_ref:[TM, Fi]            f32 VMEM accumulator for the A @ H partial sums
    """
    k = pl.program_id(1)

    @pl.when(k == 0)
    def _():
        acc_ref[...] = jnp.zeros_like(acc_ref)

    if resident_h:
        start = pl.multiple_of(k * tk, tk)
        h_blk = h_ref[pl.ds(start, tk), :]
    else:
        h_blk = h_ref[...]

    # Message passing partial sum on the MXU: bf16 x bf16 -> f32 accumulate.
    acc_ref[...] += jnp.dot(a_ref[...], h_blk,
                            preferred_element_type=jnp.float32)

    # Finalize once per row tile: bf16 linear layer + f32 bias, one
    # lane-dense (multiple-of-128 lanes) store.
    @pl.when(k == pl.num_programs(1) - 1)
    def _():
        o_ref[...] = (
            jnp.dot(acc_ref[...].astype(jnp.bfloat16), w_ref[...],
                    preferred_element_type=jnp.float32)
            + b_ref[...]
        ).astype(o_ref.dtype)


def gcn_forward(adj, h, weight, bias, *, tm=512, tk=1024,
                force_resident_h=None):
    """GCN forward: out = (A @ H) @ W^T + b.

    adj:    [N, N] float, A[dst, src] = 1.0 for edge src -> dst
    h:      [N, F_in] node features
    weight: [F_out, F_in]  (nn.Linear layout)
    bias:   [F_out]
    """
    n, f_in = h.shape
    f_out = weight.shape[0]

    n_aligned = _round_up(n, 128)
    f_in_p = _round_up(f_in, 128)
    f_out_p = _round_up(f_out, 128)

    # Clamp tiles to the problem; keep >= 2 row tiles when the graph is big
    # enough so the "parallel" row axis gives both v7x TensorCores work.
    tm = min(tm, n_aligned)
    if n_aligned >= 256:
        tm = min(tm, max(128, (n_aligned // 2 // 128) * 128))
    tk = min(tk, n_aligned)

    vmem_cap = (_vmem_capacity_bytes() * 3) // 4
    headroom = 4 << 20

    def n_cols_for(tk_):
        return _round_up(n, tk_)

    def resident_h_fits(tk_):
        # Constant-index H is still double-buffered by the pipeline.
        return 2 * n_cols_for(tk_) * f_in_p * 2 <= vmem_cap // 3

    resident_h = (resident_h_fits(tk) if force_resident_h is None
                  else bool(force_resident_h))

    def vmem_estimate(tm_, tk_, res_):
        h_bytes = (2 * n_cols_for(tk_) * f_in_p * 2 if res_
                   else 2 * tk_ * f_in_p * 2)
        return (2 * tm_ * tk_ * 2            # double-buffered bf16 A tiles
                + h_bytes                     # H (resident or tiled), bf16
                + 2 * f_in_p * f_out_p * 2    # W^T (bf16)
                + 2 * f_out_p * 4             # bias
                + 2 * tm_ * f_out_p * 4       # output tile
                + tm_ * f_in_p * 4)           # f32 accumulator scratch

    # Shrink tiles until the live-VMEM budget fits under the per-core cap.
    while (vmem_estimate(tm, tk, resident_h) + headroom > vmem_cap
           and (tm > 128 or tk > 128)):
        if tk >= tm and tk > 128:
            tk = max(128, (tk // 2 // 128) * 128)
        else:
            tm = max(128, (tm // 2 // 128) * 128)
        if force_resident_h is None:
            resident_h = resident_h_fits(tk)

    n_rows = _round_up(n, tm)
    n_cols = _round_up(n, tk)

    # Adjacency is exactly {0,1}: bf16 is lossless and halves the O(N^2)
    # HBM traffic. H/W in bf16 is standard GNN precision; accumulate in f32.
    a_p = _pad_cast(adj, (n_rows, n_cols), jnp.bfloat16)
    h_p = _pad_cast(h, (n_cols, f_in_p), jnp.bfloat16)
    w_p = _pad_cast(weight.T, (f_in_p, f_out_p), jnp.bfloat16)
    b_p = _pad_cast(bias.reshape(1, -1), (1, f_out_p), jnp.float32)

    if resident_h:
        h_spec = pl.BlockSpec((n_cols, f_in_p), lambda i, k: (0, 0))
    else:
        h_spec = pl.BlockSpec((tk, f_in_p), lambda i, k: (k, 0))

    n_row_tiles = n_rows // tm
    flops = int(2 * n_rows * n_cols * f_in_p
                + 2 * n_rows * f_in_p * f_out_p)
    h_reads = 1 if resident_h else n_row_tiles
    bytes_accessed = int(a_p.size * 2 + h_p.size * 2 * h_reads
                         + w_p.size * 2 + b_p.size * 4
                         + n_rows * f_out_p * 4)

    vmem_limit = int(min(max(vmem_estimate(tm, tk, resident_h) + headroom,
                             16 << 20),
                         vmem_cap))

    kernel = functools.partial(_gcn_kernel, tk=tk, resident_h=resident_h)

    out = pl.pallas_call(
        kernel,
        out_shape=jax.ShapeDtypeStruct((n_rows, f_out_p), jnp.float32),
        grid_spec=pltpu.PrefetchScalarGridSpec(
            num_scalar_prefetch=0,
            grid=(n_row_tiles, n_cols // tk),
            in_specs=[
                pl.BlockSpec((tm, tk), lambda i, k: (i, k)),           # A tile
                h_spec,                                                # H
                pl.BlockSpec((f_in_p, f_out_p), lambda i, k: (0, 0)),  # W^T
                pl.BlockSpec((1, f_out_p), lambda i, k: (0, 0)),       # bias
            ],
            out_specs=pl.BlockSpec((tm, f_out_p), lambda i, k: (i, 0)),
            scratch_shapes=[pltpu.VMEM((tm, f_in_p), jnp.float32)],
        ),
        compiler_params=pltpu.CompilerParams(
            dimension_semantics=("parallel", "arbitrary"),
            vmem_limit_bytes=vmem_limit,
        ),
        cost_estimate=pl.CostEstimate(
            flops=flops, transcendentals=0, bytes_accessed=bytes_accessed),
    )(a_p, h_p, w_p, b_p)

    return out[:n, :f_out]


if __name__ == "__main__":
    key = jax.random.PRNGKey(0)

    def make_inputs(k, n, f_in, f_out):
        k_adj, k_h, k_w, k_b = jax.random.split(k, 4)
        adj = (jax.random.uniform(k_adj, (n, n)) < 0.4).astype(jnp.float32)
        h = jax.random.normal(k_h, (n, f_in), dtype=jnp.float32)
        bound = 1.0 / (f_in ** 0.5)
        w = jax.random.uniform(k_w, (f_out, f_in), minval=-bound, maxval=bound)
        b = jax.random.uniform(k_b, (f_out,), minval=-bound, maxval=bound)
        return adj, h, w, b

    def reference(adj, h, w, b):
        # Mirror the kernel's precision choices (bf16 A/H/W, bf16 agg into
        # the linear layer, f32 accumulation and bias) with f32 math.
        a32 = adj.astype(jnp.bfloat16).astype(jnp.float32)
        h32 = h.astype(jnp.bfloat16).astype(jnp.float32)
        agg = jnp.dot(a32, h32, precision=jax.lax.Precision.HIGHEST)
        agg = agg.astype(jnp.bfloat16).astype(jnp.float32)
        w32 = w.astype(jnp.bfloat16).astype(jnp.float32)
        return jnp.dot(agg, w32.T, precision=jax.lax.Precision.HIGHEST) + b

    k1, k2 = jax.random.split(key)

    # Small, module-consistent shapes (N=8 nodes, in_feats=16, out_feats=32).
    adj, h, w, b = make_inputs(k1, 8, 16, 32)
    out = jax.block_until_ready(gcn_forward(adj, h, w, b))
    ref = reference(adj, h, w, b)
    assert out.shape == (8, 32)
    assert jnp.allclose(out, ref, atol=2e-2, rtol=2e-2)

    # Multi-tile case: (rows, K) grid + accumulator gating, VMEM-resident H.
    adj, h, w, b = make_inputs(k2, 320, 48, 96)
    out = jax.block_until_ready(gcn_forward(adj, h, w, b, tm=128, tk=128))
    ref = reference(adj, h, w, b)
    assert out.shape == (320, 96)
    assert jnp.allclose(out, ref, atol=2e-2, rtol=2e-2)

    # Same problem through the tiled-H fallback path (large-graph regime).
    out = jax.block_until_ready(
        gcn_forward(adj, h, w, b, tm=128, tk=128, force_resident_h=False))
    assert jnp.allclose(out, ref, atol=2e-2, rtol=2e-2)

    print("KERNEL_OK")
</pallas_src>

<mosaic_0001>
module attributes {stable_mosaic.version = 11 : i64} {
  func.func @_gcn_kernel(%arg0: i32, %arg1: i32, %arg2: memref<128x128xbf16, #tpu.memory_space<vmem>>, %arg3: memref<128x128xbf16, #tpu.memory_space<vmem>>, %arg4: memref<128x128xbf16, #tpu.memory_space<vmem>>, %arg5: memref<1x128xf32, #tpu.memory_space<vmem>>, %arg6: memref<128x128xf32, #tpu.memory_space<vmem>>, %arg7: memref<128x128xf32, #tpu.memory_space<vmem>>) attributes {dimension_semantics = [#tpu.dimension_semantics<parallel>, #tpu.dimension_semantics<arbitrary>], iteration_bounds = array<i64: 1, 1>, scalar_prefetch = 0 : i64, scratch_operands = 1 : i64, tpu.core_type = #tpu.core_type<tc>, window_params = [{transform_indices = @transform_0, window_bounds = array<i64: 128, 128>}, {pipeline_mode = #tpu.pipeline_mode<synchronous>, transform_indices = @transform_1, window_bounds = array<i64: 128, 128>}, {pipeline_mode = #tpu.pipeline_mode<synchronous>, transform_indices = @transform_2, window_bounds = array<i64: 128, 128>}, {pipeline_mode = #tpu.pipeline_mode<synchronous>, transform_indices = @transform_3, window_bounds = array<i64: 1, 128>}, {transform_indices = @transform_4, window_bounds = array<i64: 128, 128>}]} {
    %c0_i32 = arith.constant 0 : i32
    %0 = arith.cmpi eq, %arg1, %c0_i32 : i32
    %1 = arith.extui %0 : i1 to i32
    %c0_i32_0 = arith.constant 0 : i32
    %2 = arith.cmpi ne, %1, %c0_i32_0 : i32
    scf.if %2 {
      %cst_9 = arith.constant 0.000000e+00 : f32
      %15 = vector.broadcast %cst_9 : f32 to vector<128x128xf32>
      %c0_10 = arith.constant 0 : index
      %c0_11 = arith.constant 0 : index
      %16 = vector.load %arg7[%c0_10, %c0_11] : memref<128x128xf32, #tpu.memory_space<vmem>>, vector<128x128xf32>
      tpu.vector_store %arg7[%c0_10, %c0_11], %15 {strides = array<i32>} : memref<128x128xf32, #tpu.memory_space<vmem>>, vector<128x128xf32>,
    } else {
    }
    %c128_i32 = arith.constant 128 : i32
    %3 = arith.muli %arg1, %c128_i32 : i32
    %4 = tpu.assume_multiple %3, 128 : i32
    %5 = arith.index_cast %4 : i32 to index
    %c0 = arith.constant 0 : index
    %6 = vector.load %arg3[%5, %c0] : memref<128x128xbf16, #tpu.memory_space<vmem>>, vector<128x128xbf16>
    %c0_1 = arith.constant 0 : index
    %c0_2 = arith.constant 0 : index
    %7 = vector.load %arg7[%c0_1, %c0_2] : memref<128x128xf32, #tpu.memory_space<vmem>>, vector<128x128xf32>
    %c0_3 = arith.constant 0 : index
    %c0_4 = arith.constant 0 : index
    %8 = vector.load %arg2[%c0_3, %c0_4] : memref<128x128xbf16, #tpu.memory_space<vmem>>, vector<128x128xbf16>
    %cst = arith.constant dense<0.000000e+00> : vector<128x128xf32>
    %9 = tpu.matmul %8, %6, %cst {dimension_numbers = #tpu.dot_dimension_numbers<[1], [0], [0], [1], [0, 0, 1, 1], [], []>} : vector<128x128xbf16>, vector<128x128xbf16>, vector<128x128xf32> -> vector<128x128xf32>
    %10 = arith.addf %7, %9 : vector<128x128xf32>
    %c0_5 = arith.constant 0 : index
    %c0_6 = arith.constant 0 : index
    %11 = vector.load %arg7[%c0_5, %c0_6] : memref<128x128xf32, #tpu.memory_space<vmem>>, vector<128x128xf32>
    tpu.vector_store %arg7[%c0_5, %c0_6], %10 {strides = array<i32>} : memref<128x128xf32, #tpu.memory_space<vmem>>, vector<128x128xf32>,
    %c0_i32_7 = arith.constant 0 : i32
    %12 = arith.cmpi eq, %arg1, %c0_i32_7 : i32
    %13 = arith.extui %12 : i1 to i32
    %c0_i32_8 = arith.constant 0 : i32
    %14 = arith.cmpi ne, %13, %c0_i32_8 : i32
    scf.if %14 {
      %c0_9 = arith.constant 0 : index
      %c0_10 = arith.constant 0 : index
      %15 = vector.load %arg7[%c0_9, %c0_10] : memref<128x128xf32, #tpu.memory_space<vmem>>, vector<128x128xf32>
      %16 = arith.truncf %15 : vector<128x128xf32> to vector<128x128xbf16>
      %c0_11 = arith.constant 0 : index
      %c0_12 = arith.constant 0 : index
      %17 = vector.load %arg4[%c0_11, %c0_12] : memref<128x128xbf16, #tpu.memory_space<vmem>>, vector<128x128xbf16>
      %cst_13 = arith.constant dense<0.000000e+00> : vector<128x128xf32>
      %18 = tpu.matmul %16, %17, %cst_13 {dimension_numbers = #tpu.dot_dimension_numbers<[1], [0], [0], [1], [0, 0, 1, 1], [], []>} : vector<128x128xbf16>, vector<128x128xbf16>, vector<128x128xf32> -> vector<128x128xf32>
      %c0_14 = arith.constant 0 : index
      %c0_15 = arith.constant 0 : index
      %19 = vector.load %arg5[%c0_14, %c0_15] : memref<1x128xf32, #tpu.memory_space<vmem>>, vector<1x128xf32>
      %20 = vector.broadcast %19 : vector<1x128xf32> to vector<128x128xf32>
      %21 = arith.addf %18, %20 : vector<128x128xf32>
      %c0_16 = arith.constant 0 : index
      %c0_17 = arith.constant 0 : index
      %22 = vector.load %arg6[%c0_16, %c0_17] : memref<128x128xf32, #tpu.memory_space<vmem>>, vector<128x128xf32>
      tpu.vector_store %arg6[%c0_16, %c0_17], %21 {strides = array<i32>} : memref<128x128xf32, #tpu.memory_space<vmem>>, vector<128x128xf32>,
    } else {
    }
    return
  }
  func.func @transform_0(%arg0: i32, %arg1: i32) -> (i32, i32) {
    %c0_i32 = arith.constant 0 : i32
    return %arg0, %arg1 : i32, i32
  }
  func.func @transform_1(%arg0: i32, %arg1: i32) -> (i32, i32) {
    %c0_i32 = arith.constant 0 : i32
    %c0_i32_0 = arith.constant 0 : i32
    %c0_i32_1 = arith.constant 0 : i32
    return %c0_i32, %c0_i32_0 : i32, i32
  }
  func.func @transform_2(%arg0: i32, %arg1: i32) -> (i32, i32) {
    %c0_i32 = arith.constant 0 : i32
    %c0_i32_0 = arith.constant 0 : i32
    %c0_i32_1 = arith.constant 0 : i32
    return %c0_i32, %c0_i32_0 : i32, i32
  }
  func.func @transform_3(%arg0: i32, %arg1: i32) -> (i32, i32) {
    %c0_i32 = arith.constant 0 : i32
    %c0_i32_0 = arith.constant 0 : i32
    %c0_i32_1 = arith.constant 0 : i32
    return %c0_i32, %c0_i32_0 : i32, i32
  }
  func.func @transform_4(%arg0: i32, %arg1: i32) -> (i32, i32) {
    %c0_i32 = arith.constant 0 : i32
    %c0_i32_0 = arith.constant 0 : i32
    return %arg0, %c0_i32 : i32, i32
  }
}

</mosaic_0001>

<llo_original>
// kernel: tpu_custom_call.1
$region0: #{tpu_custom_call.1}
  #allocation0 [shape = 'u32[]', space=smem, size = 0x4, offset = 0x4, fixed_abs, tag = 'smem constant byte address 0x4 - core index']
  #allocation1 [shape = 'u32[144,128]{1,0:T(1,128)}', space=vmem, size = 0x12000, scoped, tag = 'internal scratch']
  #allocation2 [shape = 'f32[128,128]{1,0:T(8,128)}', space=vmem, size = 0x10000, scoped, tag = 'scratch operand']
  %s0 = inlined_call_operand.hbm [shape: bf16[128,128], index: 0, kind: input, shape index: {}]
  %s1 = inlined_call_operand.hbm [shape: bf16[128,128], index: 1, kind: input, shape index: {}]
  %s2 = inlined_call_operand.hbm [shape: bf16[128,128], index: 2, kind: input, shape index: {}]
  %s3 = inlined_call_operand.vmem [shape: f32[1,128], index: 3, kind: input, shape index: {}]
  %s4 = inlined_call_operand.hbm [shape: f32[128,128], index: 4, kind: output, shape index: {}]
  %s5 = sld [smem:[#allocation0]]
  $region46: #{tpu_custom_call.1} parent=0
    _
  %s7 = ssub.s32 1, %s5
  %s8 = scalar_select 0, %s7, %s5
  $region1: #{tpu_custom_call.1} parent=0
    #allocation3 [shape = 'u8[32768]{0}', space=vmem, size = 0x8000, scoped, tag = 'input window, operand 0, single buffered']
    #allocation4 [shape = 's32[1]{0}', space=sflag, size = 0x4, scoped, tag = 'scoped memory for tpu_custom_call.1']
    #allocation5 [shape = 's32[1]{0}', space=sflag, size = 0x4, scoped, tag = 'scoped memory for tpu_custom_call.1']
    #allocation6 [shape = 'u8[32768]{0}', space=vmem, size = 0x8000, scoped, tag = 'input window, operand 1, single buffered']
    #allocation7 [shape = 's32[1]{0}', space=sflag, size = 0x4, scoped, tag = 'scoped memory for tpu_custom_call.1']
    #allocation8 [shape = 'u8[32768]{0}', space=vmem, size = 0x8000, scoped, tag = 'input window, operand 2, single buffered']
    #allocation9 [shape = 'u8[65536]{0}', space=vmem, size = 0x10000, scoped, tag = 'output window, operand 0, single buffered']
    %9 = vsyncpa [#allocation4], 0
    %10 = vsyncpa [#allocation7], 0
    %11 = vsyncpa [#allocation5], 0
    // Predicated region
    $region2: #{tpu_custom_call.1} parent=1 // pred_check
      _
    $region3: #{tpu_custom_call.1} parent=1 // pred_check_branch
      %13 = sbr.rel (0) target = $region5
    $region4: #{tpu_custom_call.1} parent=1 // pred_region
      %s15 = ssub.s32 1024, 1024
      %16 = vsyncadd [#allocation4], %s15
      %s17 = sshll.u32 [#allocation3], 4
      %s18 = int_to_ptr.vmem [resolvable:$true] %s17
      %23 = dma.hbm_to_vmem [thread:$0]  %s0, 1024, %s18, [#allocation4], 64, 64, 4
    $region5: #{tpu_custom_call.1} parent=1 // pred_fallthru
      _
    // Predicated region
    $region6: #{tpu_custom_call.1} parent=1 // pred_check
      _
    $region7: #{tpu_custom_call.1} parent=1 // pred_check_branch
      %25 = sbr.rel (0) target = $region9
    $region8: #{tpu_custom_call.1} parent=1 // pred_region
      %s27 = ssub.s32 1024, 1024
      %28 = vsyncadd [#allocation7], %s27
      %s29 = sshll.u32 [#allocation6], 4
      %s30 = int_to_ptr.vmem [resolvable:$true] %s29
      %35 = dma.hbm_to_vmem [thread:$0]  %s1, 1024, %s30, [#allocation7], 64, 64, 4
    $region9: #{tpu_custom_call.1} parent=1 // pred_fallthru
      _
    // Predicated region
    $region10: #{tpu_custom_call.1} parent=1 // pred_check
      _
    $region11: #{tpu_custom_call.1} parent=1 // pred_check_branch
      %37 = sbr.rel (0) target = $region13
    $region12: #{tpu_custom_call.1} parent=1 // pred_region
      %s39 = ssub.s32 1024, 1024
      %40 = vsyncadd [#allocation7], %s39
      %s41 = sshll.u32 [#allocation8], 4
      %s42 = int_to_ptr.vmem [resolvable:$true] %s41
      %47 = dma.hbm_to_vmem [thread:$0]  %s2, 1024, %s42, [#allocation7], 64, 64, 4
    $region13: #{tpu_custom_call.1} parent=1 // pred_fallthru
      _
    // Predicated region
    $region14: #{tpu_custom_call.1} parent=1 // pred_check
      _
    $region15: #{tpu_custom_call.1} parent=1 // pred_check_branch
      %49 = sbr.rel (0) target = $region17
    $region16: #{tpu_custom_call.1} parent=1 // pred_region
      _
    $region17: #{tpu_custom_call.1} parent=1 // pred_fallthru
      _
    // Predicated region
    $region18: #{tpu_custom_call.1} parent=1 // pred_check
      _
    $region19: #{tpu_custom_call.1} parent=1 // pred_check_branch
      %51 = sbr.rel (0) target = $region21
    $region20: #{tpu_custom_call.1} parent=1 // pred_region
      %52 = dma.done [#allocation4], 1024
    $region21: #{tpu_custom_call.1} parent=1 // pred_fallthru
      _
    // Predicated region
    $region22: #{tpu_custom_call.1} parent=1 // pred_check
      _
    $region23: #{tpu_custom_call.1} parent=1 // pred_check_branch
      %54 = sbr.rel (0) target = $region25
    $region24: #{tpu_custom_call.1} parent=1 // pred_region
      %55 = dma.done [#allocation7], 1024
    $region25: #{tpu_custom_call.1} parent=1 // pred_fallthru
      _
    // Predicated region
    $region26: #{tpu_custom_call.1} parent=1 // pred_check
      _
    $region27: #{tpu_custom_call.1} parent=1 // pred_check_branch
      %57 = sbr.rel (0) target = $region29
    $region28: #{tpu_custom_call.1} parent=1 // pred_region
      %58 = dma.done [#allocation7], 1024
    $region29: #{tpu_custom_call.1} parent=1 // pred_fallthru
      _
    %p60 = scmp.eq.s32.totalorder 0, 0
    // Predicated region
    $region30: #{tpu_custom_call.1} parent=1 // pred_check
      %p61 = pneg %p60
    $region31: #{tpu_custom_call.1} parent=1 // pred_check_branch
      %63 = sbr.rel (%p61) target = $region33
    $region32: #{tpu_custom_call.1} parent=1 // pred_region
      %64 = vst [vmem:[#allocation2] sm:$0xff] 0.0
      %65 = vst [vmem:[#allocation2 + $0x8] sm:$0xff] 0.0
      %66 = vst [vmem:[#allocation2 + $0x10] sm:$0xff] 0.0
      %67 = vst [vmem:[#allocation2 + $0x18] sm:$0xff] 0.0
      %68 = vst [vmem:[#allocation2 + $0x20] sm:$0xff] 0.0
      %69 = vst [vmem:[#allocation2 + $0x28] sm:$0xff] 0.0
      %70 = vst [vmem:[#allocation2 + $0x30] sm:$0xff] 0.0
      %71 = vst [vmem:[#allocation2 + $0x38] sm:$0xff] 0.0
      %72 = vst [vmem:[#allocation2 + $0x40] sm:$0xff] 0.0
      %73 = vst [vmem:[#allocation2 + $0x48] sm:$0xff] 0.0
      %74 = vst [vmem:[#allocation2 + $0x50] sm:$0xff] 0.0
      %75 = vst [vmem:[#allocation2 + $0x58] sm:$0xff] 0.0
      %76 = vst [vmem:[#allocation2 + $0x60] sm:$0xff] 0.0
      %77 = vst [vmem:[#allocation2 + $0x68] sm:$0xff] 0.0
      %78 = vst [vmem:[#allocation2 + $0x70] sm:$0xff] 0.0
      %79 = vst [vmem:[#allocation2 + $0x78] sm:$0xff] 0.0
    $region33: #{tpu_custom_call.1} parent=1 // pred_fallthru
      _
    %s80 = smul.u32 0, 128
    %s81 = sshra.s32 %s80, 3
    %s82 = sand.u32 %s80, 7
    %s83 = smul.addr %s81, 4
    %s84 = scalar_lea.vmem [#allocation6], %s83
    %v85 = vld [vmem:[%s84] sm:$0xf]
    %v86 = vld [vmem:[%s84 + $0x4] sm:$0xf]
    %v87 = vld [vmem:[%s84 + $0x8] sm:$0xf]
    %v88 = vld [vmem:[%s84 + $0xc] sm:$0xf]
    %v89 = vld [vmem:[%s84 + $0x10] sm:$0xf]
    %v90 = vld [vmem:[%s84 + $0x14] sm:$0xf]
    %v91 = vld [vmem:[%s84 + $0x18] sm:$0xf]
    %v92 = vld [vmem:[%s84 + $0x1c] sm:$0xf]
    %v93 = vld [vmem:[%s84 + $0x20] sm:$0xf]
    %v94 = vld [vmem:[%s84 + $0x24] sm:$0xf]
    %v95 = vld [vmem:[%s84 + $0x28] sm:$0xf]
    %v96 = vld [vmem:[%s84 + $0x2c] sm:$0xf]
    %v97 = vld [vmem:[%s84 + $0x30] sm:$0xf]
    %v98 = vld [vmem:[%s84 + $0x34] sm:$0xf]
    %v99 = vld [vmem:[%s84 + $0x38] sm:$0xf]
    %v100 = vld [vmem:[%s84 + $0x3c] sm:$0xf]
    %v101 = vld [vmem:[#allocation2] sm:$0xff]
    %v102 = vld [vmem:[#allocation2 + $0x8] sm:$0xff]
    %v103 = vld [vmem:[#allocation2 + $0x10] sm:$0xff]
    %v104 = vld [vmem:[#allocation2 + $0x18] sm:$0xff]
    %v105 = vld [vmem:[#allocation2 + $0x20] sm:$0xff]
    %v106 = vld [vmem:[#allocation2 + $0x28] sm:$0xff]
    %v107 = vld [vmem:[#allocation2 + $0x30] sm:$0xff]
    %v108 = vld [vmem:[#allocation2 + $0x38] sm:$0xff]
    %v109 = vld [vmem:[#allocation2 + $0x40] sm:$0xff]
    %v110 = vld [vmem:[#allocation2 + $0x48] sm:$0xff]
    %v111 = vld [vmem:[#allocation2 + $0x50] sm:$0xff]
    %v112 = vld [vmem:[#allocation2 + $0x58] sm:$0xff]
    %v113 = vld [vmem:[#allocation2 + $0x60] sm:$0xff]
    %v114 = vld [vmem:[#allocation2 + $0x68] sm:$0xff]
    %v115 = vld [vmem:[#allocation2 + $0x70] sm:$0xff]
    %v116 = vld [vmem:[#allocation2 + $0x78] sm:$0xff]
    %v117 = vld [vmem:[#allocation3] sm:$0xf]
    %v118 = vld [vmem:[#allocation3 + $0x4] sm:$0xf]
    %v119 = vld [vmem:[#allocation3 + $0x8] sm:$0xf]
    %v120 = vld [vmem:[#allocation3 + $0xc] sm:$0xf]
    %v121 = vld [vmem:[#allocation3 + $0x10] sm:$0xf]
    %v122 = vld [vmem:[#allocation3 + $0x14] sm:$0xf]
    %v123 = vld [vmem:[#allocation3 + $0x18] sm:$0xf]
    %v124 = vld [vmem:[#allocation3 + $0x1c] sm:$0xf]
    %v125 = vld [vmem:[#allocation3 + $0x20] sm:$0xf]
    %v126 = vld [vmem:[#allocation3 + $0x24] sm:$0xf]
    %v127 = vld [vmem:[#allocation3 + $0x28] sm:$0xf]
    %v128 = vld [vmem:[#allocation3 + $0x2c] sm:$0xf]
    %v129 = vld [vmem:[#allocation3 + $0x30] sm:$0xf]
    %v130 = vld [vmem:[#allocation3 + $0x34] sm:$0xf]
    %v131 = vld [vmem:[#allocation3 + $0x38] sm:$0xf]
    %v132 = vld [vmem:[#allocation3 + $0x3c] sm:$0xf]
    %v149 = vunpack.c.l.b16 %v117
    %v150 = vunpack.c.l.b16 %v118
    %v151 = vunpack.c.l.b16 %v119
    %v152 = vunpack.c.l.b16 %v120
    %v153 = vunpack.c.l.b16 %v121
    %v154 = vunpack.c.l.b16 %v122
    %v155 = vunpack.c.l.b16 %v123
    %v156 = vunpack.c.l.b16 %v124
    %v157 = vunpack.c.l.b16 %v125
    %v158 = vunpack.c.l.b16 %v126
    %v159 = vunpack.c.l.b16 %v127
    %v160 = vunpack.c.l.b16 %v128
    %v161 = vunpack.c.l.b16 %v129
    %v162 = vunpack.c.l.b16 %v130
    %v163 = vunpack.c.l.b16 %v131
    %v164 = vunpack.c.l.b16 %v132
    %v165 = vpack.c.b16 %v150, %v149
    %v166 = vpack.c.b16 %v152, %v151
    %v167 = vpack.c.b16 %v154, %v153
    %v168 = vpack.c.b16 %v156, %v155
    %v169 = vpack.c.b16 %v158, %v157
    %v170 = vpack.c.b16 %v160, %v159
    %v171 = vpack.c.b16 %v162, %v161
    %v172 = vpack.c.b16 %v164, %v163
    %v197 = vunpack.c.l.b16 %v85
    %v198 = vunpack.c.l.b16 %v86
    %v199 = vunpack.c.l.b16 %v87
    %v200 = vunpack.c.l.b16 %v88
    %v201 = vunpack.c.l.b16 %v89
    %v202 = vunpack.c.l.b16 %v90
    %v203 = vunpack.c.l.b16 %v91
    %v204 = vunpack.c.l.b16 %v92
    %v205 = vunpack.c.l.b16 %v93
    %v206 = vunpack.c.l.b16 %v94
    %v207 = vunpack.c.l.b16 %v95
    %v208 = vunpack.c.l.b16 %v96
    %v209 = vunpack.c.l.b16 %v97
    %v210 = vunpack.c.l.b16 %v98
    %v211 = vunpack.c.l.b16 %v99
    %v212 = vunpack.c.l.b16 %v100
    %v213 = vpack.c.b16 %v198, %v197
    %v214 = vpack.c.b16 %v200, %v199
    %v215 = vpack.c.b16 %v202, %v201
    %v216 = vpack.c.b16 %v204, %v203
    %v217 = vpack.c.b16 %v206, %v205
    %v218 = vpack.c.b16 %v208, %v207
    %v219 = vpack.c.b16 %v210, %v209
    %v220 = vpack.c.b16 %v212, %v211
    %229 = vmatprep.subr.bf16.mxu0 0
    %230 = vmatpush1.bf16.msra.mxu0 %v220
    %231 = vmatprep.subr.bf16.mxu0 0
    %232 = vmatpush1.bf16.msra.mxu0 %v219
    %233 = vmatprep.subr.bf16.mxu0 0
    %234 = vmatpush1.bf16.msra.mxu0 %v218
    %235 = vmatprep.subr.bf16.mxu0 0
    %236 = vmatpush1.bf16.msra.mxu0 %v217
    %237 = vmatprep.subr.bf16.mxu0 0
    %238 = vmatpush1.bf16.msra.mxu0 %v216
    %239 = vmatprep.subr.bf16.mxu0 0
    %240 = vmatpush1.bf16.msra.mxu0 %v215
    %241 = vmatprep.subr.bf16.mxu0 0
    %242 = vmatpush1.bf16.msra.mxu0 %v214
    %243 = vmatprep.subr.bf16.mxu0 0
    %244 = vmatpush1.bf16.msra.mxu0 %v213
    %245 = vmatprep.subr.bf16.mxu0 0
    %246 = vmatpush2.bf16.msra.mxu0 0
    %247 = vmatprep.subr.bf16.mxu0 0
    %248 = vmatpush2.bf16.msra.mxu0 0
    %249 = vmatprep.subr.bf16.mxu0 0
    %250 = vmatpush2.bf16.msra.mxu0 0
    %251 = vmatprep.subr.bf16.mxu0 0
    %252 = vmatpush2.bf16.msra.mxu0 0
    %253 = vmatprep.subr.bf16.mxu0 0
    %254 = vmatpush2.bf16.msra.mxu0 0
    %255 = vmatprep.subr.bf16.mxu0 0
    %256 = vmatpush2.bf16.msra.mxu0 0
    %257 = vmatprep.subr.bf16.mxu0 0
    %258 = vmatpush2.bf16.msra.mxu0 0
    %259 = vmatprep.subr.bf16.mxu0 0
    %260 = vmatpush2.bf16.msra.mxu0 0
    %261 = vmatprep.mubr.bf16.mxu0 0
    %262 = vmatmul.mubr.bf16.gmra.mxu0 %v165
    %v263 = vpop.f32.mrf.mxu0
    %v264 = vadd.f32 0.0, %v263
    %v265 = vpop.f32.mrf.mxu0
    %v266 = vpop.f32.mrf.mxu0
    %v267 = vadd.f32 0.0, %v266
    %v268 = vpop.f32.mrf.mxu0
    %269 = vmatprep.mubr.bf16.mxu0 0
    %270 = vmatmul.mubr.bf16.gmra.mxu0 %v166
    %v271 = vpop.f32.mrf.mxu0
    %v272 = vadd.f32 0.0, %v271
    %v273 = vpop.f32.mrf.mxu0
    %v274 = vpop.f32.mrf.mxu0
    %v275 = vadd.f32 0.0, %v274
    %v276 = vpop.f32.mrf.mxu0
    %277 = vmatprep.mubr.bf16.mxu0 0
    %278 = vmatmul.mubr.bf16.gmra.mxu0 %v167
    %v279 = vpop.f32.mrf.mxu0
    %v280 = vadd.f32 0.0, %v279
    %v281 = vpop.f32.mrf.mxu0
    %v282 = vpop.f32.mrf.mxu0
    %v283 = vadd.f32 0.0, %v282
    %v284 = vpop.f32.mrf.mxu0
    %285 = vmatprep.mubr.bf16.mxu0 0
    %286 = vmatmul.mubr.bf16.gmra.mxu0 %v168
    %v287 = vpop.f32.mrf.mxu0
    %v288 = vadd.f32 0.0, %v287
    %v289 = vpop.f32.mrf.mxu0
    %v290 = vpop.f32.mrf.mxu0
    %v291 = vadd.f32 0.0, %v290
    %v292 = vpop.f32.mrf.mxu0
    %293 = vmatprep.mubr.bf16.mxu0 0
    %294 = vmatmul.mubr.bf16.gmra.mxu0 %v169
    %v295 = vpop.f32.mrf.mxu0
    %v296 = vadd.f32 0.0, %v295
    %v297 = vpop.f32.mrf.mxu0
    %v298 = vpop.f32.mrf.mxu0
    %v299 = vadd.f32 0.0, %v298
    %v300 = vpop.f32.mrf.mxu0
    %301 = vmatprep.mubr.bf16.mxu0 0
    %302 = vmatmul.mubr.bf16.gmra.mxu0 %v170
    %v303 = vpop.f32.mrf.mxu0
    %v304 = vadd.f32 0.0, %v303
    %v305 = vpop.f32.mrf.mxu0
    %v306 = vpop.f32.mrf.mxu0
    %v307 = vadd.f32 0.0, %v306
    %v308 = vpop.f32.mrf.mxu0
    %309 = vmatprep.mubr.bf16.mxu0 0
    %310 = vmatmul.mubr.bf16.gmra.mxu0 %v171
    %v311 = vpop.f32.mrf.mxu0
    %v312 = vadd.f32 0.0, %v311
    %v313 = vpop.f32.mrf.mxu0
    %v314 = vpop.f32.mrf.mxu0
    %v315 = vadd.f32 0.0, %v314
    %v316 = vpop.f32.mrf.mxu0
    %317 = vmatprep.mubr.bf16.mxu0 0
    %318 = vmatmul.mubr.bf16.gmra.mxu0 %v172
    %v319 = vpop.f32.mrf.mxu0
    %v320 = vadd.f32 0.0, %v319
    %v321 = vpop.f32.mrf.mxu0
    %v322 = vpop.f32.mrf.mxu0
    %v323 = vadd.f32 0.0, %v322
    %v324 = vpop.f32.mrf.mxu0
    %325 = vdwg.mxu0
    %v326 = vadd.f32 %v101, %v264
    %v327 = vadd.f32 %v102, %v267
    %v328 = vadd.f32 %v103, %v272
    %v329 = vadd.f32 %v104, %v275
    %v330 = vadd.f32 %v105, %v280
    %v331 = vadd.f32 %v106, %v283
    %v332 = vadd.f32 %v107, %v288
    %v333 = vadd.f32 %v108, %v291
    %v334 = vadd.f32 %v109, %v296
    %v335 = vadd.f32 %v110, %v299
    %v336 = vadd.f32 %v111, %v304
    %v337 = vadd.f32 %v112, %v307
    %v338 = vadd.f32 %v113, %v312
    %v339 = vadd.f32 %v114, %v315
    %v340 = vadd.f32 %v115, %v320
    %v341 = vadd.f32 %v116, %v323
    %342 = vst [vmem:[#allocation2] sm:$0xff] %v326
    %343 = vst [vmem:[#allocation2 + $0x8] sm:$0xff] %v327
    %344 = vst [vmem:[#allocation2 + $0x10] sm:$0xff] %v328
    %345 = vst [vmem:[#allocation2 + $0x18] sm:$0xff] %v329
    %346 = vst [vmem:[#allocation2 + $0x20] sm:$0xff] %v330
    %347 = vst [vmem:[#allocation2 + $0x28] sm:$0xff] %v331
    %348 = vst [vmem:[#allocation2 + $0x30] sm:$0xff] %v332
    %349 = vst [vmem:[#allocation2 + $0x38] sm:$0xff] %v333
    %350 = vst [vmem:[#allocation2 + $0x40] sm:$0xff] %v334
    %351 = vst [vmem:[#allocation2 + $0x48] sm:$0xff] %v335
    %352 = vst [vmem:[#allocation2 + $0x50] sm:$0xff] %v336
    %353 = vst [vmem:[#allocation2 + $0x58] sm:$0xff] %v337
    %354 = vst [vmem:[#allocation2 + $0x60] sm:$0xff] %v338
    %355 = vst [vmem:[#allocation2 + $0x68] sm:$0xff] %v339
    %356 = vst [vmem:[#allocation2 + $0x70] sm:$0xff] %v340
    %357 = vst [vmem:[#allocation2 + $0x78] sm:$0xff] %v341
    // Predicated region
    $region34: #{tpu_custom_call.1} parent=1 // pred_check
      %p358 = pneg %p60
    $region35: #{tpu_custom_call.1} parent=1 // pred_check_branch
      %360 = sbr.rel (%p358) target = $region37
    $region36: #{tpu_custom_call.1} parent=1 // pred_region
      %v361 = vld [vmem:[#allocation2] sm:$0xff]
      %v362 = vld [vmem:[#allocation2 + $0x8] sm:$0xff]
      %v363 = vld [vmem:[#allocation2 + $0x10] sm:$0xff]
      %v364 = vld [vmem:[#allocation2 + $0x18] sm:$0xff]
      %v365 = vld [vmem:[#allocation2 + $0x20] sm:$0xff]
      %v366 = vld [vmem:[#allocation2 + $0x28] sm:$0xff]
      %v367 = vld [vmem:[#allocation2 + $0x30] sm:$0xff]
      %v368 = vld [vmem:[#allocation2 + $0x38] sm:$0xff]
      %v369 = vld [vmem:[#allocation2 + $0x40] sm:$0xff]
      %v370 = vld [vmem:[#allocation2 + $0x48] sm:$0xff]
      %v371 = vld [vmem:[#allocation2 + $0x50] sm:$0xff]
      %v372 = vld [vmem:[#allocation2 + $0x58] sm:$0xff]
      %v373 = vld [vmem:[#allocation2 + $0x60] sm:$0xff]
      %v374 = vld [vmem:[#allocation2 + $0x68] sm:$0xff]
      %v375 = vld [vmem:[#allocation2 + $0x70] sm:$0xff]
      %v376 = vld [vmem:[#allocation2 + $0x78] sm:$0xff]
      %v377 = vpack.c.bf16 %v362, %v361
      %v378 = vpack.c.bf16 %v364, %v363
      %v379 = vpack.c.bf16 %v366, %v365
      %v380 = vpack.c.bf16 %v368, %v367
      %v381 = vpack.c.bf16 %v370, %v369
      %v382 = vpack.c.bf16 %v372, %v371
      %v383 = vpack.c.bf16 %v374, %v373
      %v384 = vpack.c.bf16 %v376, %v375
      %v385 = vld [vmem:[#allocation8] sm:$0xf]
      %v386 = vld [vmem:[#allocation8 + $0x4] sm:$0xf]
      %v387 = vld [vmem:[#allocation8 + $0x8] sm:$0xf]
      %v388 = vld [vmem:[#allocation8 + $0xc] sm:$0xf]
      %v389 = vld [vmem:[#allocation8 + $0x10] sm:$0xf]
      %v390 = vld [vmem:[#allocation8 + $0x14] sm:$0xf]
      %v391 = vld [vmem:[#allocation8 + $0x18] sm:$0xf]
      %v392 = vld [vmem:[#allocation8 + $0x1c] sm:$0xf]
      %v393 = vld [vmem:[#allocation8 + $0x20] sm:$0xf]
      %v394 = vld [vmem:[#allocation8 + $0x24] sm:$0xf]
      %v395 = vld [vmem:[#allocation8 + $0x28] sm:$0xf]
      %v396 = vld [vmem:[#allocation8 + $0x2c] sm:$0xf]
      %v397 = vld [vmem:[#allocation8 + $0x30] sm:$0xf]
      %v398 = vld [vmem:[#allocation8 + $0x34] sm:$0xf]
      %v399 = vld [vmem:[#allocation8 + $0x38] sm:$0xf]
      %v400 = vld [vmem:[#allocation8 + $0x3c] sm:$0xf]
      %v401 = vld [vmem:[%s3] sm:$0x1]
      %v403 = vlaneseq
      %v404 = vshrl.u32 %v403, 7
      %v405 = vsub.s32 0, %v404
      %v406 = vrot.slane %v401, %v405
      %v424 = vunpack.c.l.b16 %v385
      %v425 = vunpack.c.l.b16 %v386
      %v426 = vunpack.c.l.b16 %v387
      %v427 = vunpack.c.l.b16 %v388
      %v428 = vunpack.c.l.b16 %v389
      %v429 = vunpack.c.l.b16 %v390
      %v430 = vunpack.c.l.b16 %v391
      %v431 = vunpack.c.l.b16 %v392
      %v432 = vunpack.c.l.b16 %v393
      %v433 = vunpack.c.l.b16 %v394
      %v434 = vunpack.c.l.b16 %v395
      %v435 = vunpack.c.l.b16 %v396
      %v436 = vunpack.c.l.b16 %v397
      %v437 = vunpack.c.l.b16 %v398
      %v438 = vunpack.c.l.b16 %v399
      %v439 = vunpack.c.l.b16 %v400
      %v440 = vpack.c.b16 %v425, %v424
      %v441 = vpack.c.b16 %v427, %v426
      %v442 = vpack.c.b16 %v429, %v428
      %v443 = vpack.c.b16 %v431, %v430
      %v444 = vpack.c.b16 %v433, %v432
      %v445 = vpack.c.b16 %v435, %v434
      %v446 = vpack.c.b16 %v437, %v436
      %v447 = vpack.c.b16 %v439, %v438
      %456 = vmatprep.subr.bf16.mxu0 0
      %457 = vmatpush1.bf16.msra.mxu0 %v447
      %458 = vmatprep.subr.bf16.mxu0 0
      %459 = vmatpush1.bf16.msra.mxu0 %v446
      %460 = vmatprep.subr.bf16.mxu0 0
      %461 = vmatpush1.bf16.msra.mxu0 %v445
      %462 = vmatprep.subr.bf16.mxu0 0
      %463 = vmatpush1.bf16.msra.mxu0 %v444
      %464 = vmatprep.subr.bf16.mxu0 0
      %465 = vmatpush1.bf16.msra.mxu0 %v443
      %466 = vmatprep.subr.bf16.mxu0 0
      %467 = vmatpush1.bf16.msra.mxu0 %v442
      %468 = vmatprep.subr.bf16.mxu0 0
      %469 = vmatpush1.bf16.msra.mxu0 %v441
      %470 = vmatprep.subr.bf16.mxu0 0
      %471 = vmatpush1.bf16.msra.mxu0 %v440
      %472 = vmatprep.subr.bf16.mxu0 0
      %473 = vmatpush2.bf16.msra.mxu0 0
      %474 = vmatprep.subr.bf16.mxu0 0
      %475 = vmatpush2.bf16.msra.mxu0 0
      %476 = vmatprep.subr.bf16.mxu0 0
      %477 = vmatpush2.bf16.msra.mxu0 0
      %478 = vmatprep.subr.bf16.mxu0 0
      %479 = vmatpush2.bf16.msra.mxu0 0
      %480 = vmatprep.subr.bf16.mxu0 0
      %481 = vmatpush2.bf16.msra.mxu0 0
      %482 = vmatprep.subr.bf16.mxu0 0
      %483 = vmatpush2.bf16.msra.mxu0 0
      %484 = vmatprep.subr.bf16.mxu0 0
      %485 = vmatpush2.bf16.msra.mxu0 0
      %486 = vmatprep.subr.bf16.mxu0 0
      %487 = vmatpush2.bf16.msra.mxu0 0
      %488 = vmatprep.mubr.bf16.mxu0 0
      %489 = vmatmul.mubr.bf16.gmra.mxu0 %v377
      %v490 = vpop.f32.mrf.mxu0
      %v491 = vadd.f32 %v406, %v490
      %v492 = vpop.f32.mrf.mxu0
      %v493 = vpop.f32.mrf.mxu0
      %v494 = vadd.f32 %v406, %v493
      %v495 = vpop.f32.mrf.mxu0
      %496 = vmatprep.mubr.bf16.mxu0 0
      %497 = vmatmul.mubr.bf16.gmra.mxu0 %v378
      %v498 = vpop.f32.mrf.mxu0
      %v499 = vadd.f32 %v406, %v498
      %v500 = vpop.f32.mrf.mxu0
      %v501 = vpop.f32.mrf.mxu0
      %v502 = vadd.f32 %v406, %v501
      %v503 = vpop.f32.mrf.mxu0
      %504 = vmatprep.mubr.bf16.mxu0 0
      %505 = vmatmul.mubr.bf16.gmra.mxu0 %v379
      %v506 = vpop.f32.mrf.mxu0
      %v507 = vadd.f32 %v406, %v506
      %v508 = vpop.f32.mrf.mxu0
      %v509 = vpop.f32.mrf.mxu0
      %v510 = vadd.f32 %v406, %v509
      %v511 = vpop.f32.mrf.mxu0
      %512 = vmatprep.mubr.bf16.mxu0 0
      %513 = vmatmul.mubr.bf16.gmra.mxu0 %v380
      %v514 = vpop.f32.mrf.mxu0
      %v515 = vadd.f32 %v406, %v514
      %v516 = vpop.f32.mrf.mxu0
      %v517 = vpop.f32.mrf.mxu0
      %v518 = vadd.f32 %v406, %v517
      %v519 = vpop.f32.mrf.mxu0
      %520 = vmatprep.mubr.bf16.mxu0 0
      %521 = vmatmul.mubr.bf16.gmra.mxu0 %v381
      %v522 = vpop.f32.mrf.mxu0
      %v523 = vadd.f32 %v406, %v522
      %v524 = vpop.f32.mrf.mxu0
      %v525 = vpop.f32.mrf.mxu0
      %v526 = vadd.f32 %v406, %v525
      %v527 = vpop.f32.mrf.mxu0
      %528 = vmatprep.mubr.bf16.mxu0 0
      %529 = vmatmul.mubr.bf16.gmra.mxu0 %v382
      %v530 = vpop.f32.mrf.mxu0
      %v531 = vadd.f32 %v406, %v530
      %v532 = vpop.f32.mrf.mxu0
      %v533 = vpop.f32.mrf.mxu0
      %v534 = vadd.f32 %v406, %v533
      %v535 = vpop.f32.mrf.mxu0
      %536 = vmatprep.mubr.bf16.mxu0 0
      %537 = vmatmul.mubr.bf16.gmra.mxu0 %v383
      %v538 = vpop.f32.mrf.mxu0
      %v539 = vadd.f32 %v406, %v538
      %v540 = vpop.f32.mrf.mxu0
      %v541 = vpop.f32.mrf.mxu0
      %v542 = vadd.f32 %v406, %v541
      %v543 = vpop.f32.mrf.mxu0
      %544 = vmatprep.mubr.bf16.mxu0 0
      %545 = vmatmul.mubr.bf16.gmra.mxu0 %v384
      %v546 = vpop.f32.mrf.mxu0
      %v547 = vadd.f32 %v406, %v546
      %v548 = vpop.f32.mrf.mxu0
      %v549 = vpop.f32.mrf.mxu0
      %v550 = vadd.f32 %v406, %v549
      %v551 = vpop.f32.mrf.mxu0
      %552 = vdwg.mxu0
      %553 = vst [vmem:[#allocation9] sm:$0xff] %v491
      %554 = vst [vmem:[#allocation9 + $0x8] sm:$0xff] %v494
      %555 = vst [vmem:[#allocation9 + $0x10] sm:$0xff] %v499
      %556 = vst [vmem:[#allocation9 + $0x18] sm:$0xff] %v502
      %557 = vst [vmem:[#allocation9 + $0x20] sm:$0xff] %v507
      %558 = vst [vmem:[#allocation9 + $0x28] sm:$0xff] %v510
      %559 = vst [vmem:[#allocation9 + $0x30] sm:$0xff] %v515
      %560 = vst [vmem:[#allocation9 + $0x38] sm:$0xff] %v518
      %561 = vst [vmem:[#allocation9 + $0x40] sm:$0xff] %v523
      %562 = vst [vmem:[#allocation9 + $0x48] sm:$0xff] %v526
      %563 = vst [vmem:[#allocation9 + $0x50] sm:$0xff] %v531
      %564 = vst [vmem:[#allocation9 + $0x58] sm:$0xff] %v534
      %565 = vst [vmem:[#allocation9 + $0x60] sm:$0xff] %v539
      %566 = vst [vmem:[#allocation9 + $0x68] sm:$0xff] %v542
      %567 = vst [vmem:[#allocation9 + $0x70] sm:$0xff] %v547
      %568 = vst [vmem:[#allocation9 + $0x78] sm:$0xff] %v550
    $region37: #{tpu_custom_call.1} parent=1 // pred_fallthru
      _
    // Predicated region
    $region38: #{tpu_custom_call.1} parent=1 // pred_check
      _
    $region39: #{tpu_custom_call.1} parent=1 // pred_check_branch
      %570 = sbr.rel (0) target = $region41
    $region40: #{tpu_custom_call.1} parent=1 // pred_region
      %s572 = ssub.s32 2048, 2048
      %573 = vsyncadd [#allocation5], %s572
      %s574 = sshll.u32 [#allocation9], 4
      %s575 = int_to_ptr.vmem [resolvable:$true] %s574
      %580 = dma.vmem_to_hbm [thread:$0]  %s575, 2048, %s4, [#allocation5], 128, 128, 8
    $region41: #{tpu_custom_call.1} parent=1 // pred_fallthru
      _
    // Predicated region
    $region42: #{tpu_custom_call.1} parent=1 // pred_check
      _
    $region43: #{tpu_custom_call.1} parent=1 // pred_check_branch
      %582 = sbr.rel (0) target = $region45
    $region44: #{tpu_custom_call.1} parent=1 // pred_region
      %583 = dma.done [#allocation5], 2048
    $region45: #{tpu_custom_call.1} parent=1 // pred_fallthru
      _
    %584 = vsyncpa [#allocation4], 1
    %585 = vsyncpa [#allocation7], 1
    %586 = vsyncpa [#allocation5], 1

</llo_original>
